<compile_context>
chip_gen: v6e
topology: v6e:2x2x1
jax: 0.10.0
libtpu: 0.0.40
codegen_flags: <defaults>
</compile_context>

<pallas_src>
import math

import jax
import jax.numpy as jnp
from jax.experimental import pallas as pl
from jax.experimental.pallas import tpu as pltpu

# dtype used to DMA the input block (accumulation / weights stay f32).
INPUT_DTYPE = jnp.bfloat16

# (C_in, C_out, K, stride, padding) for conv1..conv7 — matches the module.
_CONV_CFG = [
    (1, 16, 4, 3, 0),
    (16, 32, 4, 3, 0),
    (32, 64, 3, 2, 0),
    (64, 64, 3, 2, 1),
    (64, 64, 2, 2, 1),
    (64, 64, 2, 2, 1),
    (64, 64, 2, 1, 0),
]


# ----------------------------------------------------------------------------
# Parameters (deterministic, in-script), PyTorch layout / init.
# ----------------------------------------------------------------------------
def init_params(key):
    params = {"convs": []}
    for (c_in, c_out, k, stride, pad) in _CONV_CFG:
        key, sub = jax.random.split(key)
        bound = 1.0 / math.sqrt(c_in * k)  # PyTorch Conv1d default init bound
        w = jax.random.uniform(sub, (c_out, c_in, k), jnp.float32,
                               minval=-bound, maxval=bound)
        params["convs"].append((w, stride, pad))
    key, sub = jax.random.split(key)
    fan_in, fan_out = 64, 1
    limit = math.sqrt(6.0 / (fan_in + fan_out))      # xavier_uniform
    params["fc_w"] = jax.random.uniform(sub, (fan_out, fan_in), jnp.float32,
                                        minval=-limit, maxval=limit)
    params["fc_b"] = jnp.zeros((fan_out,), jnp.float32)
    return params


# ----------------------------------------------------------------------------
# Build-time full collapse: 7 convs + mean-pool + Linear -> one (1, L) vector.
# ----------------------------------------------------------------------------
def _conv_as_dense(w, l_in, stride, pad, dtype):
    """Fold a bias-free Conv1d into M of shape (L_in*C_in, L_out*C_out) such
    that, with channels-last-flattened activations h (N, L_in*C_in), h @ M
    equals the conv output flattened the same way.  Taps falling into the zero
    padding get no entry (exact zeros)."""
    c_out, c_in, k = w.shape
    l_out = (l_in + 2 * pad - k) // stride + 1
    pos = (jnp.arange(l_out)[:, None] * stride
           + jnp.arange(k)[None, :] - pad)                              # (L_out, K)
    onehot = (pos[..., None] == jnp.arange(l_in)).astype(jnp.float32)   # (L_out, K, L_in)
    # M[p, ci, j, co] = sum_k onehot[j, k, p] * w[co, ci, k]
    m = jnp.einsum("jkp,ock->pcjo", onehot, w)
    return m.reshape(l_in * c_in, l_out * c_out).astype(dtype), l_out


def build_fused_params(params, length):
    """Compose M1..M7 and the (mean-pool + Linear(64,1)) head in f32 into a
    single row vector w_row of shape (1, length*C_in0) plus the bias."""
    c_in0 = params["convs"][0][0].shape[1]          # = 1
    l_in = length
    w_full = None
    for (w, stride, pad) in params["convs"]:
        m, l_in = _conv_as_dense(w, l_in, stride, pad, jnp.float32)
        w_full = m if w_full is None else w_full @ m      # f32 composition
    c_last = params["convs"][-1][0].shape[0]              # 64
    # head: out = mean_j(h[:, j, :]) @ fc_w.T + fc_b  ==  h_flat @ head_col + fc_b
    head_col = jnp.tile(params["fc_w"][0] / l_in, (l_in,)).reshape(l_in * c_last, 1)
    w_full = w_full @ head_col                             # (length*C_in0, 1)
    return {
        "w_row": w_full.reshape(1, length * c_in0).astype(jnp.float32),
        "head_b": params["fc_b"].reshape(1, 1).astype(jnp.float32),
    }


# ----------------------------------------------------------------------------
# Fused Pallas kernel: one VPU multiply + XLU reduce per batch block.
# ----------------------------------------------------------------------------
def _collapsed_kernel(x_ref, w_ref, b_ref, o_ref):
    # x_ref: (block_n, L) bf16   w_ref: (1, L) f32   b_ref: (1, 1) f32
    # o_ref: (block_n, 1) f32
    h = x_ref[...].astype(jnp.float32)
    o_ref[...] = jnp.sum(h * w_ref[...], axis=-1, keepdims=True) + b_ref[...]


def strided_convnet_forward(fused, x_ncl, block_n=256):
    """x_ncl: (N, 1, L) PyTorch layout. Returns (N, 1) float32."""
    n, c_in, length = x_ncl.shape
    x = jnp.transpose(x_ncl, (0, 2, 1)).reshape(n, length * c_in)  # NCL -> (N, L*C)
    x = x.astype(INPUT_DTYPE)                      # halve the only HBM stream
    pad_rows = (-n) % block_n                      # MXU/vreg-aligned batch blocks
    if pad_rows:
        x = jnp.pad(x, ((0, pad_rows), (0, 0)))
    n_pad = x.shape[0]
    lc = x.shape[1]

    out = pl.pallas_call(
        _collapsed_kernel,
        out_shape=jax.ShapeDtypeStruct((n_pad, 1), jnp.float32),
        grid=(n_pad // block_n,),
        in_specs=[
            pl.BlockSpec((block_n, lc), lambda i: (i, 0)),   # streamed input
            pl.BlockSpec((1, lc), lambda i: (0, 0)),         # collapsed weights (~1 KB)
            pl.BlockSpec((1, 1), lambda i: (0, 0)),          # bias
        ],
        out_specs=pl.BlockSpec((block_n, 1), lambda i: (i, 0)),
        compiler_params=pltpu.CompilerParams(
            # batch blocks are independent -> both TensorCores on v7x when the
            # batch spans >= 2 blocks
            dimension_semantics=("parallel",),
            # actual use is ~0.5 MB at block_n=256 (bf16 input double-buffered);
            # 32 MiB keeps headroom on every generation incl. v7x's 64 MiB core
            vmem_limit_bytes=32 * 1024 * 1024),
    )(x, fused["w_row"], fused["head_b"])
    return out[:n]


# ----------------------------------------------------------------------------
# Pure-JAX reference (mirrors the PyTorch module) for self-verification.
# ----------------------------------------------------------------------------
def reference_forward(params, x_ncl):
    x = x_ncl.astype(jnp.float32)
    for (w, stride, pad) in params["convs"]:
        x = jax.lax.conv_general_dilated(
            x, w, window_strides=(stride,), padding=[(pad, pad)],
            dimension_numbers=("NCH", "OIH", "NCH"))
    pooled = jnp.mean(x, axis=-1)                  # adaptive_avg_pool1d(., 1)
    return pooled @ params["fc_w"].T + params["fc_b"]


if __name__ == "__main__":
    key = jax.random.PRNGKey(0)
    key, pkey, xkey = jax.random.split(key, 3)
    params = init_params(pkey)

    # small input consistent with the module: batch=2, channels=1, length=256
    n, length = 2, 256
    x = jax.random.normal(xkey, (n, 1, length), jnp.float32)

    fused = build_fused_params(params, length)     # eager, once per length
    fwd = jax.jit(strided_convnet_forward)
    out = fwd(fused, x)
    jax.block_until_ready(out)
    assert out.shape == (n, 1)

    # f32 weight composition; only source of error is the bf16 input cast.
    ref = reference_forward(params, x)
    err = float(jnp.max(jnp.abs(out - ref)))
    assert err < 1e-2, f"mismatch vs reference (max abs err = {err})"

    print("KERNEL_OK")
</pallas_src>

<mosaic_0001>
module attributes {stable_mosaic.version = 11 : i64} {
  func.func @_collapsed_kernel(%arg0: i32, %arg1: memref<256x256xbf16, #tpu.memory_space<vmem>>, %arg2: memref<1x256xf32, #tpu.memory_space<vmem>>, %arg3: memref<1x1xf32, #tpu.memory_space<vmem>>, %arg4: memref<256x1xf32, #tpu.memory_space<vmem>>) attributes {dimension_semantics = [#tpu.dimension_semantics<parallel>], iteration_bounds = array<i64: 1>, scalar_prefetch = 0 : i64, scratch_operands = 0 : i64, tpu.core_type = #tpu.core_type<tc>, window_params = [{transform_indices = @transform_0, window_bounds = array<i64: 256, 256>}, {pipeline_mode = #tpu.pipeline_mode<synchronous>, transform_indices = @transform_1, window_bounds = array<i64: 1, 256>}, {pipeline_mode = #tpu.pipeline_mode<synchronous>, transform_indices = @transform_2, window_bounds = array<i64: 1, 1>}, {transform_indices = @transform_3, window_bounds = array<i64: 256, 1>}]} {
    %c0 = arith.constant 0 : index
    %c0_0 = arith.constant 0 : index
    %0 = vector.load %arg1[%c0, %c0_0] : memref<256x256xbf16, #tpu.memory_space<vmem>>, vector<256x256xbf16>
    %1 = arith.extf %0 : vector<256x256xbf16> to vector<256x256xf32>
    %c0_1 = arith.constant 0 : index
    %c0_2 = arith.constant 0 : index
    %2 = vector.load %arg2[%c0_1, %c0_2] : memref<1x256xf32, #tpu.memory_space<vmem>>, vector<1x256xf32>
    %3 = vector.broadcast %2 : vector<1x256xf32> to vector<256x256xf32>
    %4 = arith.mulf %1, %3 : vector<256x256xf32>
    %cst = arith.constant dense<0.000000e+00> : vector<256xf32>
    %5 = vector.multi_reduction <add>, %4, %cst [1] : vector<256x256xf32> to vector<256xf32>
    %6 = vector.shape_cast %5 : vector<256xf32> to vector<256x1xf32>
    %c0_3 = arith.constant 0 : index
    %c0_4 = arith.constant 0 : index
    %7 = vector.load %arg3[%c0_3, %c0_4] : memref<1x1xf32, #tpu.memory_space<vmem>>, vector<1x1xf32>
    %8 = vector.broadcast %7 : vector<1x1xf32> to vector<256x1xf32>
    %9 = arith.addf %6, %8 : vector<256x1xf32>
    %c0_5 = arith.constant 0 : index
    %c0_6 = arith.constant 0 : index
    %10 = vector.load %arg4[%c0_5, %c0_6] : memref<256x1xf32, #tpu.memory_space<vmem>>, vector<256x1xf32>
    tpu.vector_store %arg4[%c0_5, %c0_6], %9 {strides = array<i32>} : memref<256x1xf32, #tpu.memory_space<vmem>>, vector<256x1xf32>,
    return
  }
  func.func @transform_0(%arg0: i32) -> (i32, i32) {
    %c0_i32 = arith.constant 0 : i32
    %c0_i32_0 = arith.constant 0 : i32
    return %arg0, %c0_i32 : i32, i32
  }
  func.func @transform_1(%arg0: i32) -> (i32, i32) {
    %c0_i32 = arith.constant 0 : i32
    %c0_i32_0 = arith.constant 0 : i32
    %c0_i32_1 = arith.constant 0 : i32
    return %c0_i32, %c0_i32_0 : i32, i32
  }
  func.func @transform_2(%arg0: i32) -> (i32, i32) {
    %c0_i32 = arith.constant 0 : i32
    %c0_i32_0 = arith.constant 0 : i32
    %c0_i32_1 = arith.constant 0 : i32
    return %c0_i32, %c0_i32_0 : i32, i32
  }
  func.func @transform_3(%arg0: i32) -> (i32, i32) {
    %c0_i32 = arith.constant 0 : i32
    %c0_i32_0 = arith.constant 0 : i32
    return %arg0, %c0_i32 : i32, i32
  }
}

</mosaic_0001>

<llo_original>
// kernel: strided_convnet_forward.1
$region0: #{strided_convnet_forward.1}
  #allocation0 [shape = 'u32[]', space=smem, size = 0x4, offset = 0x4, fixed_abs, tag = 'smem constant byte address 0x4 - core index']
  #allocation1 [shape = 'u32[144,128]{1,0:T(1,128)}', space=vmem, size = 0x12000, scoped, tag = 'internal scratch']
  #allocation2 [shape = 'f32[1,1]{1,0:T(1,128)S(1)}', space=vmem, size = 0x200, scoped, tag = 'scoped memory for strided_convnet_forward.1']
  %s0 = inlined_call_operand.vmem [shape: bf16[256,256], index: 0, kind: input, shape index: {}]
  %s1 = inlined_call_operand.vmem [shape: f32[1,256], index: 1, kind: input, shape index: {}]
  %s2 = inlined_call_operand.<no memory space> [shape: f32[1,1], index: 2, kind: input, shape index: {}]
  %s3 = inlined_call_operand.vmem [shape: f32[256,1], index: 3, kind: output, shape index: {}]
  %s4 = sld [smem:[#allocation0]]
  $region22: #{strided_convnet_forward.1} parent=0
    _
  %s6 = ssub.s32 1, %s4
  %s7 = scalar_select 0, %s6, %s4
  %v8 = vstv %s2
  %9 = vst [vmem:[#allocation2] sm:$0x1] %v8
  // Predicated region
  $region2: #{strided_convnet_forward.1} parent=0 // pred_check
    _
  $region3: #{strided_convnet_forward.1} parent=0 // pred_check_branch
    %11 = sbr.rel (0) target = $region5
  $region4: #{strided_convnet_forward.1} parent=0 // pred_region
    _
  $region5: #{strided_convnet_forward.1} parent=0 // pred_fallthru
    _
  // Predicated region
  $region6: #{strided_convnet_forward.1} parent=0 // pred_check
    _
  $region7: #{strided_convnet_forward.1} parent=0 // pred_check_branch
    %13 = sbr.rel (0) target = $region9
  $region8: #{strided_convnet_forward.1} parent=0 // pred_region
    _
  $region9: #{strided_convnet_forward.1} parent=0 // pred_fallthru
    _
  // Predicated region
  $region10: #{strided_convnet_forward.1} parent=0 // pred_check
    _
  $region11: #{strided_convnet_forward.1} parent=0 // pred_check_branch
    %15 = sbr.rel (0) target = $region13
  $region12: #{strided_convnet_forward.1} parent=0 // pred_region
    _
  $region13: #{strided_convnet_forward.1} parent=0 // pred_fallthru
    _
  %v16 = vld [vmem:[%s0] sm:$0xff]
  %v17 = vld [vmem:[%s0 + $0x8] sm:$0xff]
  %v18 = vld [vmem:[%s0 + $0x10] sm:$0xff]
  %v19 = vld [vmem:[%s0 + $0x18] sm:$0xff]
  %v20 = vld [vmem:[%s0 + $0x20] sm:$0xff]
  %v21 = vld [vmem:[%s0 + $0x28] sm:$0xff]
  %v22 = vld [vmem:[%s0 + $0x30] sm:$0xff]
  %v23 = vld [vmem:[%s0 + $0x38] sm:$0xff]
  %v24 = vld [vmem:[%s0 + $0x40] sm:$0xff]
  %v25 = vld [vmem:[%s0 + $0x48] sm:$0xff]
  %v26 = vld [vmem:[%s0 + $0x50] sm:$0xff]
  %v27 = vld [vmem:[%s0 + $0x58] sm:$0xff]
  %v28 = vld [vmem:[%s0 + $0x60] sm:$0xff]
  %v29 = vld [vmem:[%s0 + $0x68] sm:$0xff]
  %v30 = vld [vmem:[%s0 + $0x70] sm:$0xff]
  %v31 = vld [vmem:[%s0 + $0x78] sm:$0xff]
  %v32 = vld [vmem:[%s0 + $0x80] sm:$0xff]
  %v33 = vld [vmem:[%s0 + $0x88] sm:$0xff]
  %v34 = vld [vmem:[%s0 + $0x90] sm:$0xff]
  %v35 = vld [vmem:[%s0 + $0x98] sm:$0xff]
  %v36 = vld [vmem:[%s0 + $0xa0] sm:$0xff]
  %v37 = vld [vmem:[%s0 + $0xa8] sm:$0xff]
  %v38 = vld [vmem:[%s0 + $0xb0] sm:$0xff]
  %v39 = vld [vmem:[%s0 + $0xb8] sm:$0xff]
  %v40 = vld [vmem:[%s0 + $0xc0] sm:$0xff]
  %v41 = vld [vmem:[%s0 + $0xc8] sm:$0xff]
  %v42 = vld [vmem:[%s0 + $0xd0] sm:$0xff]
  %v43 = vld [vmem:[%s0 + $0xd8] sm:$0xff]
  %v44 = vld [vmem:[%s0 + $0xe0] sm:$0xff]
  %v45 = vld [vmem:[%s0 + $0xe8] sm:$0xff]
  %v46 = vld [vmem:[%s0 + $0xf0] sm:$0xff]
  %v47 = vld [vmem:[%s0 + $0xf8] sm:$0xff]
  %v48 = vunpack.c.l.bf16 %v16
  %v49 = vunpack.c.h.bf16 %v16
  %v50 = vunpack.c.l.bf16 %v17
  %v51 = vunpack.c.h.bf16 %v17
  %v52 = vunpack.c.l.bf16 %v18
  %v53 = vunpack.c.h.bf16 %v18
  %v54 = vunpack.c.l.bf16 %v19
  %v55 = vunpack.c.h.bf16 %v19
  %v56 = vunpack.c.l.bf16 %v20
  %v57 = vunpack.c.h.bf16 %v20
  %v58 = vunpack.c.l.bf16 %v21
  %v59 = vunpack.c.h.bf16 %v21
  %v60 = vunpack.c.l.bf16 %v22
  %v61 = vunpack.c.h.bf16 %v22
  %v62 = vunpack.c.l.bf16 %v23
  %v63 = vunpack.c.h.bf16 %v23
  %v64 = vunpack.c.l.bf16 %v24
  %v65 = vunpack.c.h.bf16 %v24
  %v66 = vunpack.c.l.bf16 %v25
  %v67 = vunpack.c.h.bf16 %v25
  %v68 = vunpack.c.l.bf16 %v26
  %v69 = vunpack.c.h.bf16 %v26
  %v70 = vunpack.c.l.bf16 %v27
  %v71 = vunpack.c.h.bf16 %v27
  %v72 = vunpack.c.l.bf16 %v28
  %v73 = vunpack.c.h.bf16 %v28
  %v74 = vunpack.c.l.bf16 %v29
  %v75 = vunpack.c.h.bf16 %v29
  %v76 = vunpack.c.l.bf16 %v30
  %v77 = vunpack.c.h.bf16 %v30
  %v78 = vunpack.c.l.bf16 %v31
  %v79 = vunpack.c.h.bf16 %v31
  %v80 = vunpack.c.l.bf16 %v32
  %v81 = vunpack.c.h.bf16 %v32
  %v82 = vunpack.c.l.bf16 %v33
  %v83 = vunpack.c.h.bf16 %v33
  %v84 = vunpack.c.l.bf16 %v34
  %v85 = vunpack.c.h.bf16 %v34
  %v86 = vunpack.c.l.bf16 %v35
  %v87 = vunpack.c.h.bf16 %v35
  %v88 = vunpack.c.l.bf16 %v36
  %v89 = vunpack.c.h.bf16 %v36
  %v90 = vunpack.c.l.bf16 %v37
  %v91 = vunpack.c.h.bf16 %v37
  %v92 = vunpack.c.l.bf16 %v38
  %v93 = vunpack.c.h.bf16 %v38
  %v94 = vunpack.c.l.bf16 %v39
  %v95 = vunpack.c.h.bf16 %v39
  %v96 = vunpack.c.l.bf16 %v40
  %v97 = vunpack.c.h.bf16 %v40
  %v98 = vunpack.c.l.bf16 %v41
  %v99 = vunpack.c.h.bf16 %v41
  %v100 = vunpack.c.l.bf16 %v42
  %v101 = vunpack.c.h.bf16 %v42
  %v102 = vunpack.c.l.bf16 %v43
  %v103 = vunpack.c.h.bf16 %v43
  %v104 = vunpack.c.l.bf16 %v44
  %v105 = vunpack.c.h.bf16 %v44
  %v106 = vunpack.c.l.bf16 %v45
  %v107 = vunpack.c.h.bf16 %v45
  %v108 = vunpack.c.l.bf16 %v46
  %v109 = vunpack.c.h.bf16 %v46
  %v110 = vunpack.c.l.bf16 %v47
  %v111 = vunpack.c.h.bf16 %v47
  %v112 = vld [vmem:[%s1] sm:$0x3]
  %v114 = vlaneseq
  %v115 = vshrl.u32 %v114, 7
  %v116 = vsub.s32 0, %v115
  %v117 = vrot.slane %v112, %v116
  %v118 = vlaneseq
  %v119 = vshrl.u32 %v118, 7
  %v120 = vsub.s32 1, %v119
  %v121 = vrot.slane %v112, %v120
  %v124 = vmul.f32 %v48, %v117
  %v125 = vmul.f32 %v49, %v121
  %v126 = vmul.f32 %v50, %v117
  %v127 = vmul.f32 %v51, %v121
  %v128 = vmul.f32 %v52, %v117
  %v129 = vmul.f32 %v53, %v121
  %v130 = vmul.f32 %v54, %v117
  %v131 = vmul.f32 %v55, %v121
  %v132 = vmul.f32 %v56, %v117
  %v133 = vmul.f32 %v57, %v121
  %v134 = vmul.f32 %v58, %v117
  %v135 = vmul.f32 %v59, %v121
  %v136 = vmul.f32 %v60, %v117
  %v137 = vmul.f32 %v61, %v121
  %v138 = vmul.f32 %v62, %v117
  %v139 = vmul.f32 %v63, %v121
  %v140 = vmul.f32 %v64, %v117
  %v141 = vmul.f32 %v65, %v121
  %v142 = vmul.f32 %v66, %v117
  %v143 = vmul.f32 %v67, %v121
  %v144 = vmul.f32 %v68, %v117
  %v145 = vmul.f32 %v69, %v121
  %v146 = vmul.f32 %v70, %v117
  %v147 = vmul.f32 %v71, %v121
  %v148 = vmul.f32 %v72, %v117
  %v149 = vmul.f32 %v73, %v121
  %v150 = vmul.f32 %v74, %v117
  %v151 = vmul.f32 %v75, %v121
  %v152 = vmul.f32 %v76, %v117
  %v153 = vmul.f32 %v77, %v121
  %v154 = vmul.f32 %v78, %v117
  %v155 = vmul.f32 %v79, %v121
  %v156 = vmul.f32 %v80, %v117
  %v157 = vmul.f32 %v81, %v121
  %v158 = vmul.f32 %v82, %v117
  %v159 = vmul.f32 %v83, %v121
  %v160 = vmul.f32 %v84, %v117
  %v161 = vmul.f32 %v85, %v121
  %v162 = vmul.f32 %v86, %v117
  %v163 = vmul.f32 %v87, %v121
  %v164 = vmul.f32 %v88, %v117
  %v165 = vmul.f32 %v89, %v121
  %v166 = vmul.f32 %v90, %v117
  %v167 = vmul.f32 %v91, %v121
  %v168 = vmul.f32 %v92, %v117
  %v169 = vmul.f32 %v93, %v121
  %v170 = vmul.f32 %v94, %v117
  %v171 = vmul.f32 %v95, %v121
  %v172 = vmul.f32 %v96, %v117
  %v173 = vmul.f32 %v97, %v121
  %v174 = vmul.f32 %v98, %v117
  %v175 = vmul.f32 %v99, %v121
  %v176 = vmul.f32 %v100, %v117
  %v177 = vmul.f32 %v101, %v121
  %v178 = vmul.f32 %v102, %v117
  %v179 = vmul.f32 %v103, %v121
  %v180 = vmul.f32 %v104, %v117
  %v181 = vmul.f32 %v105, %v121
  %v182 = vmul.f32 %v106, %v117
  %v183 = vmul.f32 %v107, %v121
  %v184 = vmul.f32 %v108, %v117
  %v185 = vmul.f32 %v109, %v121
  %v186 = vmul.f32 %v110, %v117
  %v187 = vmul.f32 %v111, %v121
  %v188 = vadd.f32 %v124, %v125
  %189 = vadd.xlane.f32.xlu0 %v188
  %v190 = vpop.xlane.xlu0 %189
  %v191 = vadd.f32 %v126, %v127
  %192 = vadd.xlane.f32.xlu0 %v191
  %v193 = vpop.xlane.xlu0 %192
  %v194 = vadd.f32 %v128, %v129
  %195 = vadd.xlane.f32.xlu0 %v194
  %v196 = vpop.xlane.xlu0 %195
  %v197 = vadd.f32 %v130, %v131
  %198 = vadd.xlane.f32.xlu0 %v197
  %v199 = vpop.xlane.xlu0 %198
  %v200 = vadd.f32 %v132, %v133
  %201 = vadd.xlane.f32.xlu0 %v200
  %v202 = vpop.xlane.xlu0 %201
  %v203 = vadd.f32 %v134, %v135
  %204 = vadd.xlane.f32.xlu0 %v203
  %v205 = vpop.xlane.xlu0 %204
  %v206 = vadd.f32 %v136, %v137
  %207 = vadd.xlane.f32.xlu0 %v206
  %v208 = vpop.xlane.xlu0 %207
  %v209 = vadd.f32 %v138, %v139
  %210 = vadd.xlane.f32.xlu0 %v209
  %v211 = vpop.xlane.xlu0 %210
  %v212 = vadd.f32 %v140, %v141
  %213 = vadd.xlane.f32.xlu0 %v212
  %v214 = vpop.xlane.xlu0 %213
  %v215 = vadd.f32 %v142, %v143
  %216 = vadd.xlane.f32.xlu0 %v215
  %v217 = vpop.xlane.xlu0 %216
  %v218 = vadd.f32 %v144, %v145
  %219 = vadd.xlane.f32.xlu0 %v218
  %v220 = vpop.xlane.xlu0 %219
  %v221 = vadd.f32 %v146, %v147
  %222 = vadd.xlane.f32.xlu0 %v221
  %v223 = vpop.xlane.xlu0 %222
  %v224 = vadd.f32 %v148, %v149
  %225 = vadd.xlane.f32.xlu0 %v224
  %v226 = vpop.xlane.xlu0 %225
  %v227 = vadd.f32 %v150, %v151
  %228 = vadd.xlane.f32.xlu0 %v227
  %v229 = vpop.xlane.xlu0 %228
  %v230 = vadd.f32 %v152, %v153
  %231 = vadd.xlane.f32.xlu0 %v230
  %v232 = vpop.xlane.xlu0 %231
  %v233 = vadd.f32 %v154, %v155
  %234 = vadd.xlane.f32.xlu0 %v233
  %v235 = vpop.xlane.xlu0 %234
  %v236 = vadd.f32 %v156, %v157
  %237 = vadd.xlane.f32.xlu0 %v236
  %v238 = vpop.xlane.xlu0 %237
  %v239 = vadd.f32 %v158, %v159
  %240 = vadd.xlane.f32.xlu0 %v239
  %v241 = vpop.xlane.xlu0 %240
  %v242 = vadd.f32 %v160, %v161
  %243 = vadd.xlane.f32.xlu0 %v242
  %v244 = vpop.xlane.xlu0 %243
  %v245 = vadd.f32 %v162, %v163
  %246 = vadd.xlane.f32.xlu0 %v245
  %v247 = vpop.xlane.xlu0 %246
  %v248 = vadd.f32 %v164, %v165
  %249 = vadd.xlane.f32.xlu0 %v248
  %v250 = vpop.xlane.xlu0 %249
  %v251 = vadd.f32 %v166, %v167
  %252 = vadd.xlane.f32.xlu0 %v251
  %v253 = vpop.xlane.xlu0 %252
  %v254 = vadd.f32 %v168, %v169
  %255 = vadd.xlane.f32.xlu0 %v254
  %v256 = vpop.xlane.xlu0 %255
  %v257 = vadd.f32 %v170, %v171
  %258 = vadd.xlane.f32.xlu0 %v257
  %v259 = vpop.xlane.xlu0 %258
  %v260 = vadd.f32 %v172, %v173
  %261 = vadd.xlane.f32.xlu0 %v260
  %v262 = vpop.xlane.xlu0 %261
  %v263 = vadd.f32 %v174, %v175
  %264 = vadd.xlane.f32.xlu0 %v263
  %v265 = vpop.xlane.xlu0 %264
  %v266 = vadd.f32 %v176, %v177
  %267 = vadd.xlane.f32.xlu0 %v266
  %v268 = vpop.xlane.xlu0 %267
  %v269 = vadd.f32 %v178, %v179
  %270 = vadd.xlane.f32.xlu0 %v269
  %v271 = vpop.xlane.xlu0 %270
  %v272 = vadd.f32 %v180, %v181
  %273 = vadd.xlane.f32.xlu0 %v272
  %v274 = vpop.xlane.xlu0 %273
  %v275 = vadd.f32 %v182, %v183
  %276 = vadd.xlane.f32.xlu0 %v275
  %v277 = vpop.xlane.xlu0 %276
  %v278 = vadd.f32 %v184, %v185
  %279 = vadd.xlane.f32.xlu0 %v278
  %v280 = vpop.xlane.xlu0 %279
  %v281 = vadd.f32 %v186, %v187
  %282 = vadd.xlane.f32.xlu0 %v281
  %v283 = vpop.xlane.xlu0 %282
  %v284 = vld [vmem:[#allocation2] sm:$0x1]
  %v286 = vlaneseq
  %v287 = vshrl.u32 %v286, 7
  %v288 = vsub.s32 0, %v287
  %v289 = vrot.slane %v284, %v288
  %v291 = vadd.f32 %v190, %v289
  %v292 = vadd.f32 %v193, %v289
  %v293 = vadd.f32 %v196, %v289
  %v294 = vadd.f32 %v199, %v289
  %v295 = vadd.f32 %v202, %v289
  %v296 = vadd.f32 %v205, %v289
  %v297 = vadd.f32 %v208, %v289
  %v298 = vadd.f32 %v211, %v289
  %v299 = vadd.f32 %v214, %v289
  %v300 = vadd.f32 %v217, %v289
  %v301 = vadd.f32 %v220, %v289
  %v302 = vadd.f32 %v223, %v289
  %v303 = vadd.f32 %v226, %v289
  %v304 = vadd.f32 %v229, %v289
  %v305 = vadd.f32 %v232, %v289
  %v306 = vadd.f32 %v235, %v289
  %v307 = vadd.f32 %v238, %v289
  %v308 = vadd.f32 %v241, %v289
  %v309 = vadd.f32 %v244, %v289
  %v310 = vadd.f32 %v247, %v289
  %v311 = vadd.f32 %v250, %v289
  %v312 = vadd.f32 %v253, %v289
  %v313 = vadd.f32 %v256, %v289
  %v314 = vadd.f32 %v259, %v289
  %v315 = vadd.f32 %v262, %v289
  %v316 = vadd.f32 %v265, %v289
  %v317 = vadd.f32 %v268, %v289
  %v318 = vadd.f32 %v271, %v289
  %v319 = vadd.f32 %v274, %v289
  %v320 = vadd.f32 %v277, %v289
  %v321 = vadd.f32 %v280, %v289
  %v322 = vadd.f32 %v283, %v289
  %vm323 = vcmask 7168
  %324 = vst.msk [vmem:[%s3] sm:$0xff] %vm323, %v291
  %325 = vst.msk [vmem:[%s3 + $0x8] sm:$0xff] %vm323, %v292
  %326 = vst.msk [vmem:[%s3 + $0x10] sm:$0xff] %vm323, %v293
  %327 = vst.msk [vmem:[%s3 + $0x18] sm:$0xff] %vm323, %v294
  %328 = vst.msk [vmem:[%s3 + $0x20] sm:$0xff] %vm323, %v295
  %329 = vst.msk [vmem:[%s3 + $0x28] sm:$0xff] %vm323, %v296
  %330 = vst.msk [vmem:[%s3 + $0x30] sm:$0xff] %vm323, %v297
  %331 = vst.msk [vmem:[%s3 + $0x38] sm:$0xff] %vm323, %v298
  %332 = vst.msk [vmem:[%s3 + $0x40] sm:$0xff] %vm323, %v299
  %333 = vst.msk [vmem:[%s3 + $0x48] sm:$0xff] %vm323, %v300
  %334 = vst.msk [vmem:[%s3 + $0x50] sm:$0xff] %vm323, %v301
  %335 = vst.msk [vmem:[%s3 + $0x58] sm:$0xff] %vm323, %v302
  %336 = vst.msk [vmem:[%s3 + $0x60] sm:$0xff] %vm323, %v303
  %337 = vst.msk [vmem:[%s3 + $0x68] sm:$0xff] %vm323, %v304
  %338 = vst.msk [vmem:[%s3 + $0x70] sm:$0xff] %vm323, %v305
  %339 = vst.msk [vmem:[%s3 + $0x78] sm:$0xff] %vm323, %v306
  %340 = vst.msk [vmem:[%s3 + $0x80] sm:$0xff] %vm323, %v307
  %341 = vst.msk [vmem:[%s3 + $0x88] sm:$0xff] %vm323, %v308
  %342 = vst.msk [vmem:[%s3 + $0x90] sm:$0xff] %vm323, %v309
  %343 = vst.msk [vmem:[%s3 + $0x98] sm:$0xff] %vm323, %v310
  %344 = vst.msk [vmem:[%s3 + $0xa0] sm:$0xff] %vm323, %v311
  %345 = vst.msk [vmem:[%s3 + $0xa8] sm:$0xff] %vm323, %v312
  %346 = vst.msk [vmem:[%s3 + $0xb0] sm:$0xff] %vm323, %v313
  %347 = vst.msk [vmem:[%s3 + $0xb8] sm:$0xff] %vm323, %v314
  %348 = vst.msk [vmem:[%s3 + $0xc0] sm:$0xff] %vm323, %v315
  %349 = vst.msk [vmem:[%s3 + $0xc8] sm:$0xff] %vm323, %v316
  %350 = vst.msk [vmem:[%s3 + $0xd0] sm:$0xff] %vm323, %v317
  %351 = vst.msk [vmem:[%s3 + $0xd8] sm:$0xff] %vm323, %v318
  %352 = vst.msk [vmem:[%s3 + $0xe0] sm:$0xff] %vm323, %v319
  %353 = vst.msk [vmem:[%s3 + $0xe8] sm:$0xff] %vm323, %v320
  %354 = vst.msk [vmem:[%s3 + $0xf0] sm:$0xff] %vm323, %v321
  %355 = vst.msk [vmem:[%s3 + $0xf8] sm:$0xff] %vm323, %v322
  // Predicated region
  $region14: #{strided_convnet_forward.1} parent=0 // pred_check
    _
  $region15: #{strided_convnet_forward.1} parent=0 // pred_check_branch
    %357 = sbr.rel (0) target = $region17
  $region16: #{strided_convnet_forward.1} parent=0 // pred_region
    _
  $region17: #{strided_convnet_forward.1} parent=0 // pred_fallthru
    _
  // Predicated region
  $region18: #{strided_convnet_forward.1} parent=0 // pred_check
    _
  $region19: #{strided_convnet_forward.1} parent=0 // pred_check_branch
    %359 = sbr.rel (0) target = $region21
  $region20: #{strided_convnet_forward.1} parent=0 // pred_region
    _
  $region21: #{strided_convnet_forward.1} parent=0 // pred_fallthru
    _

</llo_original>
